<compile_context>
chip_gen: v5e
topology: v5e:2x2
jax: 0.10.0
libtpu: 0.0.40
codegen_flags: <defaults>
</compile_context>

<pallas_src>
import functools

import jax
import jax.numpy as jnp
import numpy as np
from jax.experimental import pallas as pl
from jax.experimental.pallas import tpu as pltpu


def _ssn_kernel(lens_ref, x_ref, w0_ref, w1_ref, w2_ref, o_ref, *, bb, T,
                compute_dtype):
    """One grid step processes `bb` batch elements, flattened to (bb*T, D)."""
    MT, D = x_ref.shape                       # MT == bb * T, T % 8 == 0
    Bn = w1_ref.shape[1]

    x = x_ref[...]                            # [bb*T, D]  (residual path fp32)

    def mm(a, b_ref):
        b = b_ref[...]
        if compute_dtype is not None:         # optional bf16 MXU operands
            a = a.astype(compute_dtype)
            b = b.astype(compute_dtype)
        return jnp.dot(a, b, preferred_element_type=jnp.float32)

    # Hidden stack on the MXU (fp32 accumulate): s = tanh(tanh(x @ W0) @ W1)
    s = jnp.tanh(mm(x, w0_ref))               # [bb*T, H]
    s = jnp.tanh(mm(s, w1_ref))               # [bb*T, Bn]

    # Per-row length weights, O(bb*T) on the VPU:
    #   w[b, t] = 1/len[b] if t < len[b] else 0     (len == 0 guarded)
    start = pl.multiple_of(pl.program_id(0) * bb, bb)
    lens_blk = lens_ref[pl.ds(start, bb), :]                        # [bb, 1] int32
    inv_len = 1.0 / jnp.maximum(lens_blk, 1).astype(jnp.float32)    # [bb, 1]
    t_iota = jax.lax.broadcasted_iota(jnp.int32, (bb, T, 1), 1)     # [bb, T, 1]
    w3 = jnp.where(t_iota < lens_blk[:, None, :],
                   inv_len[:, None, :], 0.0)                        # [bb, T, 1]

    # Masked length-average over time: weighted sublane reduce on the free
    # (bb, T, Bn) view (no O(bb^2*T) selector matrix needed).
    s3 = s.reshape(bb, T, Bn)                                       # free: T % 8 == 0
    summary = jnp.sum(s3 * w3, axis=1)                              # [bb, Bn]

    add = jnp.tanh(mm(summary, w2_ref))                             # [bb, D]

    # Broadcast the per-batch summary over its T timesteps with a free
    # major-dim view + sublane-broadcast add (no one-hot expand matmul).
    x3 = x.reshape(bb, T, D)                                        # free: T % 8 == 0
    o_ref[...] = (x3 + add[:, None, :]).reshape(MT, D).astype(o_ref.dtype)


def _round_up(x, m):
    return (x + m - 1) // m * m


def _vmem_limit_bytes():
    """Scoped-VMEM limit sized per chip generation (~75% of physical VMEM)."""
    phys = 64 << 20                            # conservative default (v7x)
    try:
        phys = int(pltpu.get_tpu_info().vmem_capacity_bytes)
    except Exception:
        pass
    if not (16 << 20) <= phys <= (1 << 30):    # sanity clamp
        phys = 64 << 20
    return int(min(phys * 3 // 4, 96 << 20))


def _num_tensorcores():
    """Best-effort TensorCores-per-chip (v7x: 2, v5e/v6e: 1)."""
    try:
        info = pltpu.get_tpu_info()
        for attr in ("num_cores", "num_tensorcores", "tensorcores_per_chip",
                     "cores_per_chip", "core_count"):
            v = getattr(info, attr, None)
            if isinstance(v, int) and v > 0:
                return v
    except Exception:
        pass
    return 1


def _choose_batch_tile(B, T, D, H, Bn, *, budget_bytes, num_cores, itemsize=4):
    """Largest batch tile bb that divides B and fits the VMEM budget; on
    multi-TensorCore chips prefer step counts that are a multiple of the core
    count so both cores get balanced work."""
    Dp, Hp, Bnp = (_round_up(d, 128) for d in (D, H, Bn))
    Tl = _round_up(T, 128)

    def footprint(bb):
        mt = bb * T                                        # T already 8-aligned
        io = 2 * 2 * mt * Dp * itemsize                    # x + out, double-buffered
        inter = mt * (Hp + Bnp + Dp) * itemsize            # live s1/s2/out temporaries
        wts = 2 * (D * Hp + H * Bnp + Bn * Dp) * itemsize  # weights (double-buffered)
        lens = 2 * _round_up(B, 8) * 128 * 4               # resident lens block
        tiny = _round_up(bb, 8) * Tl * 4 * 3               # iota / mask / weight temps
        return io + inter + wts + lens + tiny

    cands = [bb for bb in range(1, B + 1)
             if B % bb == 0 and footprint(bb) <= budget_bytes]
    if not cands:
        return 1
    if num_cores > 1 and B > 1:
        pref = [bb for bb in cands if (B // bb) % num_cores == 0]
        if pref:
            return max(pref)
    return max(cands)


def sequence_summary_forward(xs, xlens, w0_t, w1_t, w2_t, *,
                             batch_tile=None, compute_dtype=None):
    """xs: [B, T, D] fp32, xlens: [B] int, w*_t: [in, out] (pre-transposed)."""
    B, T, D = xs.shape
    H = w0_t.shape[1]
    Bn = w1_t.shape[1]

    # Pad T to a sublane multiple so the in-kernel (bb, T, .) views are free.
    # Zero rows contribute exactly 0 to the summary and are sliced off below.
    Tp = _round_up(T, 8)
    if Tp != T:
        xs = jnp.pad(xs, ((0, 0), (0, Tp - T), (0, 0)))

    vmem_limit = _vmem_limit_bytes()
    num_cores = _num_tensorcores()
    bb = batch_tile if batch_tile is not None else _choose_batch_tile(
        B, Tp, D, H, Bn,
        budget_bytes=int(vmem_limit * 0.8),   # 20% headroom under scoped limit
        num_cores=num_cores)
    assert B % bb == 0, (B, bb)
    n_steps = B // bb

    xs_flat = xs.reshape(B * Tp, D)           # free reshape; folds B into matmul M
    lens = xlens.astype(jnp.int32).reshape(B, 1)

    kernel = functools.partial(_ssn_kernel, bb=bb, T=Tp,
                               compute_dtype=compute_dtype)

    grid_spec = pltpu.PrefetchScalarGridSpec(
        num_scalar_prefetch=0,
        grid=(n_steps,),
        in_specs=[
            pl.BlockSpec((B, 1), lambda i: (0, 0)),        # xlens: tiny, resident
            pl.BlockSpec((bb * Tp, D), lambda i: (i, 0)),  # xs rows of this tile
            pl.BlockSpec((D, H), lambda i: (0, 0)),        # weights: constant index
            pl.BlockSpec((H, Bn), lambda i: (0, 0)),
            pl.BlockSpec((Bn, D), lambda i: (0, 0)),
        ],
        out_specs=pl.BlockSpec((bb * Tp, D), lambda i: (i, 0)),
    )
    out_flat = pl.pallas_call(
        kernel,
        out_shape=jax.ShapeDtypeStruct((B * Tp, D), xs.dtype),
        grid_spec=grid_spec,
        compiler_params=pltpu.CompilerParams(
            dimension_semantics=("parallel",),
            vmem_limit_bytes=vmem_limit),
    )(lens, xs_flat, w0_t, w1_t, w2_t)

    out = out_flat.reshape(B, Tp, D)
    if Tp != T:
        out = out[:, :T, :]
    return out


def reference(xs, xlens, W0, W1, W2):
    """Plain-JAX reference of the PyTorch forward (weights in [out, in])."""
    B, T, D = xs.shape
    mask = (jnp.arange(T)[None, :] < xlens[:, None]).astype(xs.dtype)
    aw = mask / xlens[:, None].astype(xs.dtype)                    # [B, T]
    s = jnp.tanh(xs @ W0.T)
    s = jnp.tanh(s @ W1.T)
    s = jnp.einsum("bt,btk->bk", aw, s)                            # aw_ave @ s
    return xs + jnp.tanh(s @ W2.T)[:, None, :]


if __name__ == "__main__":
    # Small shapes consistent with the module: n_layers=3
    B, T = 2, 8
    input_dim, n_units, bottleneck_dim = 32, 64, 16

    key = jax.random.PRNGKey(0)
    k_x, k0, k1, k2 = jax.random.split(key, 4)

    xs = jax.random.normal(k_x, (B, T, input_dim), dtype=jnp.float32)
    xlens = jnp.array([T, 5], dtype=jnp.int32)

    # PyTorch nn.Linear-style weights [out, in], deterministic init.
    W0 = jax.random.uniform(k0, (n_units, input_dim), jnp.float32,
                            -1.0 / np.sqrt(input_dim), 1.0 / np.sqrt(input_dim))
    W1 = jax.random.uniform(k1, (bottleneck_dim, n_units), jnp.float32,
                            -1.0 / np.sqrt(n_units), 1.0 / np.sqrt(n_units))
    W2 = jax.random.uniform(k2, (input_dim, bottleneck_dim), jnp.float32,
                            -1.0 / np.sqrt(bottleneck_dim), 1.0 / np.sqrt(bottleneck_dim))

    out = sequence_summary_forward(xs, xlens, W0.T, W1.T, W2.T)
    out = jax.block_until_ready(out)

    ref = reference(xs, xlens, W0, W1, W2)
    np.testing.assert_allclose(np.asarray(out), np.asarray(ref),
                               rtol=1e-5, atol=1e-5)
    print("KERNEL_OK")
</pallas_src>

<mosaic_0001>
module attributes {stable_mosaic.version = 11 : i64} {
  func.func @_ssn_kernel(%arg0: i32, %arg1: memref<2x1xi32, #tpu.memory_space<vmem>>, %arg2: memref<16x32xf32, #tpu.memory_space<vmem>>, %arg3: memref<32x64xf32, #tpu.memory_space<vmem>>, %arg4: memref<64x16xf32, #tpu.memory_space<vmem>>, %arg5: memref<16x32xf32, #tpu.memory_space<vmem>>, %arg6: memref<16x32xf32, #tpu.memory_space<vmem>>) attributes {dimension_semantics = [#tpu.dimension_semantics<parallel>], iteration_bounds = array<i64: 1>, scalar_prefetch = 0 : i64, scratch_operands = 0 : i64, tpu.core_type = #tpu.core_type<tc>, window_params = [{pipeline_mode = #tpu.pipeline_mode<synchronous>, transform_indices = @transform_0, window_bounds = array<i64: 2, 1>}, {transform_indices = @transform_1, window_bounds = array<i64: 16, 32>}, {pipeline_mode = #tpu.pipeline_mode<synchronous>, transform_indices = @transform_2, window_bounds = array<i64: 32, 64>}, {pipeline_mode = #tpu.pipeline_mode<synchronous>, transform_indices = @transform_3, window_bounds = array<i64: 64, 16>}, {pipeline_mode = #tpu.pipeline_mode<synchronous>, transform_indices = @transform_4, window_bounds = array<i64: 16, 32>}, {transform_indices = @transform_5, window_bounds = array<i64: 16, 32>}]} {
    %c0 = arith.constant 0 : index
    %c0_0 = arith.constant 0 : index
    %0 = vector.load %arg2[%c0, %c0_0] : memref<16x32xf32, #tpu.memory_space<vmem>>, vector<16x32xf32>
    %c0_1 = arith.constant 0 : index
    %c0_2 = arith.constant 0 : index
    %1 = vector.load %arg3[%c0_1, %c0_2] : memref<32x64xf32, #tpu.memory_space<vmem>>, vector<32x64xf32>
    %cst = arith.constant dense<0.000000e+00> : vector<16x64xf32>
    %2 = tpu.matmul %0, %1, %cst {dimension_numbers = #tpu.dot_dimension_numbers<[1], [0], [0], [1], [0, 0, 1, 1], [], []>} : vector<16x32xf32>, vector<32x64xf32>, vector<16x64xf32> -> vector<16x64xf32>
    %3 = math.tanh %2 : vector<16x64xf32>
    %c0_3 = arith.constant 0 : index
    %c0_4 = arith.constant 0 : index
    %4 = vector.load %arg4[%c0_3, %c0_4] : memref<64x16xf32, #tpu.memory_space<vmem>>, vector<64x16xf32>
    %cst_5 = arith.constant dense<0.000000e+00> : vector<16x16xf32>
    %5 = tpu.matmul %3, %4, %cst_5 {dimension_numbers = #tpu.dot_dimension_numbers<[1], [0], [0], [1], [0, 0, 1, 1], [], []>} : vector<16x64xf32>, vector<64x16xf32>, vector<16x16xf32> -> vector<16x16xf32>
    %6 = math.tanh %5 : vector<16x16xf32>
    %c2_i32 = arith.constant 2 : i32
    %7 = arith.muli %arg0, %c2_i32 : i32
    %8 = tpu.assume_multiple %7, 2 : i32
    %9 = arith.index_cast %8 : i32 to index
    %c0_6 = arith.constant 0 : index
    %10 = vector.load %arg1[%9, %c0_6] : memref<2x1xi32, #tpu.memory_space<vmem>>, vector<2x1xi32>
    %c1_i32 = arith.constant 1 : i32
    %11 = vector.broadcast %c1_i32 : i32 to vector<2x1xi32>
    %12 = arith.maxsi %10, %11 : vector<2x1xi32>
    %13 = arith.sitofp %12 : vector<2x1xi32> to vector<2x1xf32>
    %cst_7 = arith.constant 1.000000e+00 : f32
    %14 = vector.broadcast %cst_7 : f32 to vector<2x1xf32>
    %15 = arith.divf %14, %13 : vector<2x1xf32>
    %16 = tpu.iota {dimensions = array<i32: 1>} : vector<2x8x1xi32>
    %17 = vector.shape_cast %10 : vector<2x1xi32> to vector<2x1x1xi32>
    %18 = vector.broadcast %17 : vector<2x1x1xi32> to vector<2x8x1xi32>
    %19 = arith.cmpi slt, %16, %18 : vector<2x8x1xi32>
    %20 = vector.shape_cast %15 : vector<2x1xf32> to vector<2x1x1xf32>
    %cst_8 = arith.constant 0.000000e+00 : f32
    %21 = vector.shape_cast %20 : vector<2x1x1xf32> to vector<2x1x1xf32>
    %22 = vector.broadcast %21 : vector<2x1x1xf32> to vector<2x8x1xf32>
    %23 = vector.broadcast %cst_8 : f32 to vector<2x8x1xf32>
    %24 = arith.select %19, %22, %23 : vector<2x8x1xi1>, vector<2x8x1xf32>
    %25 = vector.shape_cast %6 : vector<16x16xf32> to vector<2x8x16xf32>
    %26 = vector.broadcast %24 : vector<2x8x1xf32> to vector<2x8x16xf32>
    %27 = arith.mulf %25, %26 : vector<2x8x16xf32>
    %cst_9 = arith.constant dense<0.000000e+00> : vector<2x16xf32>
    %28 = vector.multi_reduction <add>, %27, %cst_9 [1] : vector<2x8x16xf32> to vector<2x16xf32>
    %c0_10 = arith.constant 0 : index
    %c0_11 = arith.constant 0 : index
    %29 = vector.load %arg5[%c0_10, %c0_11] : memref<16x32xf32, #tpu.memory_space<vmem>>, vector<16x32xf32>
    %cst_12 = arith.constant dense<0.000000e+00> : vector<2x32xf32>
    %30 = tpu.matmul %28, %29, %cst_12 {dimension_numbers = #tpu.dot_dimension_numbers<[1], [0], [0], [1], [0, 0, 1, 1], [], []>} : vector<2x16xf32>, vector<16x32xf32>, vector<2x32xf32> -> vector<2x32xf32>
    %31 = math.tanh %30 : vector<2x32xf32>
    %32 = vector.shape_cast %0 : vector<16x32xf32> to vector<2x8x32xf32>
    %33 = vector.shape_cast %31 : vector<2x32xf32> to vector<2x1x32xf32>
    %34 = vector.broadcast %33 : vector<2x1x32xf32> to vector<2x8x32xf32>
    %35 = arith.addf %32, %34 : vector<2x8x32xf32>
    %36 = vector.shape_cast %35 : vector<2x8x32xf32> to vector<16x32xf32>
    %c0_13 = arith.constant 0 : index
    %c0_14 = arith.constant 0 : index
    %37 = vector.load %arg6[%c0_13, %c0_14] : memref<16x32xf32, #tpu.memory_space<vmem>>, vector<16x32xf32>
    tpu.vector_store %arg6[%c0_13, %c0_14], %36 {strides = array<i32>} : memref<16x32xf32, #tpu.memory_space<vmem>>, vector<16x32xf32>,
    return
  }
  func.func @transform_0(%arg0: i32) -> (i32, i32) {
    %c0_i32 = arith.constant 0 : i32
    %c0_i32_0 = arith.constant 0 : i32
    %c0_i32_1 = arith.constant 0 : i32
    return %c0_i32, %c0_i32_0 : i32, i32
  }
  func.func @transform_1(%arg0: i32) -> (i32, i32) {
    %c0_i32 = arith.constant 0 : i32
    %c0_i32_0 = arith.constant 0 : i32
    return %arg0, %c0_i32 : i32, i32
  }
  func.func @transform_2(%arg0: i32) -> (i32, i32) {
    %c0_i32 = arith.constant 0 : i32
    %c0_i32_0 = arith.constant 0 : i32
    %c0_i32_1 = arith.constant 0 : i32
    return %c0_i32, %c0_i32_0 : i32, i32
  }
  func.func @transform_3(%arg0: i32) -> (i32, i32) {
    %c0_i32 = arith.constant 0 : i32
    %c0_i32_0 = arith.constant 0 : i32
    %c0_i32_1 = arith.constant 0 : i32
    return %c0_i32, %c0_i32_0 : i32, i32
  }
  func.func @transform_4(%arg0: i32) -> (i32, i32) {
    %c0_i32 = arith.constant 0 : i32
    %c0_i32_0 = arith.constant 0 : i32
    %c0_i32_1 = arith.constant 0 : i32
    return %c0_i32, %c0_i32_0 : i32, i32
  }
  func.func @transform_5(%arg0: i32) -> (i32, i32) {
    %c0_i32 = arith.constant 0 : i32
    %c0_i32_0 = arith.constant 0 : i32
    return %arg0, %c0_i32 : i32, i32
  }
}

</mosaic_0001>

<llo_original>
// kernel: tpu_custom_call.1
$region0: #{tpu_custom_call.1}
  #allocation0 [shape = 'u32[]', space=smem, size = 0x4, offset = 0x4, fixed_abs, tag = 'smem constant byte address 0x4 - core index']
  #allocation1 [shape = 'u32[72,128]{1,0:T(1,128)}', space=vmem, size = 0x9000, scoped, tag = 'internal scratch']
  %s0 = inlined_call_operand.vmem [shape: s32[2,1], index: 0, kind: input, shape index: {}]
  %s1 = inlined_call_operand.vmem [shape: f32[16,32], index: 1, kind: input, shape index: {}]
  %s2 = inlined_call_operand.vmem [shape: f32[32,64], index: 2, kind: input, shape index: {}]
  %s3 = inlined_call_operand.vmem [shape: f32[64,16], index: 3, kind: input, shape index: {}]
  %s4 = inlined_call_operand.vmem [shape: f32[16,32], index: 4, kind: input, shape index: {}]
  %s5 = inlined_call_operand.hbm [shape: f32[16,32], index: 5, kind: output, shape index: {}]
  %s6 = sld [smem:[#allocation0]]
  $region30: #{tpu_custom_call.1} parent=0
    _
  %s8 = ssub.s32 1, %s6
  %s9 = scalar_select 0, %s8, %s6
  $region1: #{tpu_custom_call.1} parent=0
    #allocation2 [shape = 'u8[8192]{0}', space=vmem, size = 0x2000, scoped, tag = 'output window, operand 0, single buffered']
    #allocation3 [shape = 's32[1]{0}', space=sflag, size = 0x4, scoped, tag = 'scoped memory for tpu_custom_call.1']
    %10 = vsyncpa [#allocation3], 0
    // Predicated region
    $region2: #{tpu_custom_call.1} parent=1 // pred_check
      _
    $region3: #{tpu_custom_call.1} parent=1 // pred_check_branch
      %12 = sbr.rel (0) target = $region5
    $region4: #{tpu_custom_call.1} parent=1 // pred_region
      _
    $region5: #{tpu_custom_call.1} parent=1 // pred_fallthru
      _
    // Predicated region
    $region6: #{tpu_custom_call.1} parent=1 // pred_check
      _
    $region7: #{tpu_custom_call.1} parent=1 // pred_check_branch
      %14 = sbr.rel (0) target = $region9
    $region8: #{tpu_custom_call.1} parent=1 // pred_region
      _
    $region9: #{tpu_custom_call.1} parent=1 // pred_fallthru
      _
    // Predicated region
    $region10: #{tpu_custom_call.1} parent=1 // pred_check
      _
    $region11: #{tpu_custom_call.1} parent=1 // pred_check_branch
      %16 = sbr.rel (0) target = $region13
    $region12: #{tpu_custom_call.1} parent=1 // pred_region
      _
    $region13: #{tpu_custom_call.1} parent=1 // pred_fallthru
      _
    // Predicated region
    $region14: #{tpu_custom_call.1} parent=1 // pred_check
      _
    $region15: #{tpu_custom_call.1} parent=1 // pred_check_branch
      %18 = sbr.rel (0) target = $region17
    $region16: #{tpu_custom_call.1} parent=1 // pred_region
      _
    $region17: #{tpu_custom_call.1} parent=1 // pred_fallthru
      _
    // Predicated region
    $region18: #{tpu_custom_call.1} parent=1 // pred_check
      _
    $region19: #{tpu_custom_call.1} parent=1 // pred_check_branch
      %20 = sbr.rel (0) target = $region21
    $region20: #{tpu_custom_call.1} parent=1 // pred_region
      _
    $region21: #{tpu_custom_call.1} parent=1 // pred_fallthru
      _
    %v21 = vld [vmem:[%s1] sm:$0xff]
    %v22 = vld [vmem:[%s1 + $0x8] sm:$0xff]
    %v23 = vld [vmem:[%s2] sm:$0xff]
    %v24 = vld [vmem:[%s2 + $0x8] sm:$0xff]
    %v25 = vld [vmem:[%s2 + $0x10] sm:$0xff]
    %v26 = vld [vmem:[%s2 + $0x18] sm:$0xff]
    %vm27 = vcmask 261120
    %v29 = vsel %vm27, %v21, 0
    %v32 = vsel %vm27, %v22, 0
    %34 = vmatpush.msra.mxu0 0.0
    %35 = vmatpush.msra.mxu0 0.0
    %36 = vmatpush.msra.mxu0 0.0
    %37 = vmatpush.msra.mxu0 0.0
    %38 = vmatpush.msra.mxu0 0.0
    %39 = vmatpush.msra.mxu0 0.0
    %40 = vmatpush.msra.mxu0 0.0
    %41 = vmatpush.msra.mxu0 0.0
    %42 = vmatpush.msra.mxu0 0.0
    %43 = vmatpush.msra.mxu0 0.0
    %44 = vmatpush.msra.mxu0 0.0
    %45 = vmatpush.msra.mxu0 0.0
    %46 = vmatpush.msra.mxu0 %v26
    %47 = vmatpush.msra.mxu0 %v25
    %48 = vmatpush.msra.mxu0 %v24
    %49 = vmatpush.msra.mxu0 %v23
    %50 = vmatmul.f32.gmra.mxu0 %v29
    %v51 = vpop.f32.mrf.mxu0
    %v52 = vadd.f32 0.0, %v51
    %53 = vmatmul.f32.gmra.mxu0 %v32
    %v54 = vpop.f32.mrf.mxu0
    %v55 = vadd.f32 0.0, %v54
    %56 = vdwg.mxu0
    %v57 = vtanh.pop %v52
    %v58 = vtanh.pop %v55
    %v59 = vld [vmem:[%s3] sm:$0xff]
    %v60 = vld [vmem:[%s3 + $0x8] sm:$0xff]
    %v61 = vld [vmem:[%s3 + $0x10] sm:$0xff]
    %v62 = vld [vmem:[%s3 + $0x18] sm:$0xff]
    %v63 = vld [vmem:[%s3 + $0x20] sm:$0xff]
    %v64 = vld [vmem:[%s3 + $0x28] sm:$0xff]
    %v65 = vld [vmem:[%s3 + $0x30] sm:$0xff]
    %v66 = vld [vmem:[%s3 + $0x38] sm:$0xff]
    %vm67 = vcmask 523264
    %v69 = vsel %vm67, %v57, 0
    %v72 = vsel %vm67, %v58, 0
    %74 = vmatpush.msra.mxu0 0.0
    %75 = vmatpush.msra.mxu0 0.0
    %76 = vmatpush.msra.mxu0 0.0
    %77 = vmatpush.msra.mxu0 0.0
    %78 = vmatpush.msra.mxu0 0.0
    %79 = vmatpush.msra.mxu0 0.0
    %80 = vmatpush.msra.mxu0 0.0
    %81 = vmatpush.msra.mxu0 0.0
    %82 = vmatpush.msra.mxu0 %v66
    %83 = vmatpush.msra.mxu0 %v65
    %84 = vmatpush.msra.mxu0 %v64
    %85 = vmatpush.msra.mxu0 %v63
    %86 = vmatpush.msra.mxu0 %v62
    %87 = vmatpush.msra.mxu0 %v61
    %88 = vmatpush.msra.mxu0 %v60
    %89 = vmatpush.msra.mxu0 %v59
    %90 = vmatmul.f32.gmra.mxu0 %v69
    %v91 = vpop.f32.mrf.mxu0
    %v92 = vadd.f32 0.0, %v91
    %93 = vmatmul.f32.gmra.mxu0 %v72
    %v94 = vpop.f32.mrf.mxu0
    %v95 = vadd.f32 0.0, %v94
    %96 = vdwg.mxu0
    %v97 = vtanh.pop %v92
    %v98 = vtanh.pop %v95
    %s99 = smul.u32 0, 2
    %s100 = scalar_lea.vmem %s0, %s99
    %v101 = vld [vmem:[%s100] sm:$0x3]
    %vm102 = vcmp.gt.s32.totalorder %v101, 1
    %v103 = vsel %vm102, %v101, 1
    %v104 = vcvt.s32.f32 %v103
    %v105 = vrcp.pop %v104
    %v106 = vmul.f32 %v104, %v105
    %v107 = vsub.f32 1.0, %v106
    %v108 = vmul.f32 %v105, %v107
    %v109 = vadd.f32 %v105, %v108
    %vm110 = vweird.f32 %v104
    %vm111 = vweird.f32 %v105
    %vm112 = vmor %vm110, %vm111
    %v113 = vsel %vm112, %v105, %v109
    %v114 = vand.u32 2147483647, %v104
    %vm115 = vcmp.eq.f32.partialorder %v114, 8.507059e+37
    %v116 = vand.u32 %v104, 2147483648
    %v117 = vor.u32 1.1754944e-38, %v116
    %v118 = vsel %vm115, %v117, %v113
    %v119 = vmul.f32 1.0, %v118
    %v120 = vlaneseq
    %v121 = vshrl.u32 %v120, 7
    %v122 = vrot.slane %v101, 1
    %v123 = vperm.slane %v101, 0
    %v124 = vperm.slane %v122, 0
    %vm125 = vcmp.lt.s32.totalorder %v121, %v123
    %vm126 = vcmp.lt.s32.totalorder %v121, %v124
    %v128 = vrot.slane %v119, 1
    %v129 = vperm.slane %v119, 0
    %v130 = vperm.slane %v128, 0
    %v133 = vsel %vm125, %v129, 0.0
    %v134 = vsel %vm126, %v130, 0.0
    %136 = vset.pattern.permute.xlu0 0
    %137 = vperm.xlu0 %136, %v133
    %v138 = vpop.permute.xlu0 %137
    %141 = vset.pattern.permute.xlu0 0
    %142 = vperm.xlu0 %141, %v134
    %v143 = vpop.permute.xlu0 %142
    %v145 = vmul.f32 %v97, %v138
    %v146 = vmul.f32 %v98, %v143
    %vm147 = vcmask 130048
    %v148 = vsel %vm147, %v145, 0.0
    %v149 = vrot.slane %v148, 4
    %v150 = vadd.f32 %v148, %v149
    %v151 = vrot.slane %v150, 2
    %v152 = vadd.f32 %v150, %v151
    %v153 = vrot.slane %v152, 1
    %v154 = vadd.f32 %v152, %v153
    %v155 = vsel %vm147, %v146, 0.0
    %v156 = vrot.slane %v155, 4
    %v157 = vadd.f32 %v155, %v156
    %v158 = vrot.slane %v157, 2
    %v159 = vadd.f32 %v157, %v158
    %v160 = vrot.slane %v159, 1
    %v161 = vadd.f32 %v159, %v160
    %v162 = vld [vmem:[%s4] sm:$0xff]
    %v163 = vld [vmem:[%s4 + $0x8] sm:$0xff]
    %vm166 = vcmask 1041409
    %v167 = vsel %vm166, %v161, %v154
    %v168 = vsel %vm147, %v167, 0
    %170 = vmatpush.msra.mxu0 0.0
    %171 = vmatpush.msra.mxu0 0.0
    %172 = vmatpush.msra.mxu0 0.0
    %173 = vmatpush.msra.mxu0 0.0
    %174 = vmatpush.msra.mxu0 0.0
    %175 = vmatpush.msra.mxu0 0.0
    %176 = vmatpush.msra.mxu0 0.0
    %177 = vmatpush.msra.mxu0 0.0
    %178 = vmatpush.msra.mxu0 0.0
    %179 = vmatpush.msra.mxu0 0.0
    %180 = vmatpush.msra.mxu0 0.0
    %181 = vmatpush.msra.mxu0 0.0
    %182 = vmatpush.msra.mxu0 0.0
    %183 = vmatpush.msra.mxu0 0.0
    %184 = vmatpush.msra.mxu0 %v163
    %185 = vmatpush.msra.mxu0 %v162
    %186 = vmatmul.f32.gmra.mxu0 %v168
    %v187 = vpop.f32.mrf.mxu0
    %v188 = vadd.f32 0.0, %v187
    %189 = vdwg.mxu0
    %v190 = vtanh.pop %v188
    %v192 = vrot.slane %v190, 1
    %v193 = vperm.slane %v190, 0
    %v194 = vperm.slane %v192, 0
    %v197 = vadd.f32 %v21, %v193
    %v198 = vadd.f32 %v22, %v194
    %199 = vst.msk [vmem:[#allocation2] sm:$0xff] %vm27, %v197
    %200 = vst.msk [vmem:[#allocation2 + $0x8] sm:$0xff] %vm27, %v198
    // Predicated region
    $region22: #{tpu_custom_call.1} parent=1 // pred_check
      _
    $region23: #{tpu_custom_call.1} parent=1 // pred_check_branch
      %202 = sbr.rel (0) target = $region25
    $region24: #{tpu_custom_call.1} parent=1 // pred_region
      %204 = vsyncadd [#allocation3], 0
      %s205 = sshll.u32 [#allocation2], 4
      %s206 = int_to_ptr.vmem [resolvable:$true] %s205
      %s207 = sshll.u32 %s5, 4
      %s208 = int_to_ptr.hbm [resolvable:$true] %s207
      %213 = dma.vmem_to_hbm [thread:$0]  %s206, 256, %s208, [#allocation3], 128, 128, 8
    $region25: #{tpu_custom_call.1} parent=1 // pred_fallthru
      _
    // Predicated region
    $region26: #{tpu_custom_call.1} parent=1 // pred_check
      _
    $region27: #{tpu_custom_call.1} parent=1 // pred_check_branch
      %215 = sbr.rel (0) target = $region29
    $region28: #{tpu_custom_call.1} parent=1 // pred_region
      %217 = dma.done [#allocation3], 256
    $region29: #{tpu_custom_call.1} parent=1 // pred_fallthru
      _
    %218 = vsyncpa [#allocation3], 1

</llo_original>
